<compile_context>
chip_gen: v6e
topology: v6e:2x2x1
jax: 0.10.0
libtpu: 0.0.40
codegen_flags: <defaults>
</compile_context>

<pallas_src>
import jax
import jax.numpy as jnp
import numpy as np
from jax.experimental import pallas as pl
from jax.experimental.pallas import tpu as pltpu


# ----------------------------- Pallas kernel -------------------------------- #

def binary_block_kernel(x_ref, b11_ref, alpha_ref, b12_ref, wscale_ref,
                        scale_ref, w_ref, out_ref, im_ref):
    # x_ref:        (nb, H, KW)    f32, row-planar (lane = ci*W + w), KW = Cin*W
    # b11/alpha/b12:(1, KW)        f32, per-channel params repeated W times
    # wscale_ref:   (1, NW)        f32, per-out-channel mean|W| repeated W times
    # scale_ref:    (1, 1)         f32 in SMEM (LearnableScale)
    # w_ref:        (3*KW, NW)     bf16 sign(W); kw taps + W-padding baked in,
    #                              the three kh taps stacked along K (im2col order)
    # out_ref:      (nb, H, NW)    f32, row-planar (lane = co*W + w), NW = Cout*W
    # im_ref:       (nb, H, 3*KW)  bf16 scratch: [row h-1 | row h | row h+1]
    nb, H, KW = x_ref.shape
    NW = out_ref.shape[2]

    x = x_ref[...]                                          # (nb, H, KW) f32

    # move11 -> PReLU -> move12 -> binary activation (forward value is sign(x))
    a = x + b11_ref[...]
    a = jnp.where(a >= 0.0, a, alpha_ref[...] * a)          # per-channel PReLU
    a = a + b12_ref[...]
    a = jnp.where(a > 0.0, 1.0, jnp.where(a < 0.0, -1.0, 0.0))   # sign(), sign(0)=0
    ab = a.astype(jnp.bfloat16)                             # exact: values in {-1,0,1}

    # im2col for the 3x3 conv's kh taps: ONE K = 3*KW matmul instead of three
    # K = KW matmuls (fills more of the 256-deep v6e/v7x MXU, one result drain).
    # The H-direction zero padding is the two tiny halo rows written below;
    # the kw taps / W-direction padding are baked into w_ref on the host.
    # Every element of im_ref is rewritten each step, so this is safe under
    # megacore "parallel" sharding of the batch grid axis.
    zrow = jnp.zeros((nb, 1, KW), jnp.bfloat16)
    im_ref[:, 0:1, 0:KW] = zrow                             # top halo of "row h-1" tap
    im_ref[:, 1:H, 0:KW] = ab[:, 0:H - 1, :]
    im_ref[:, :, KW:2 * KW] = ab
    im_ref[:, 0:H - 1, 2 * KW:3 * KW] = ab[:, 1:H, :]
    im_ref[:, H - 1:H, 2 * KW:3 * KW] = zrow                # bottom halo of "row h+1" tap

    acc = jnp.dot(im_ref[...].reshape(nb * H, 3 * KW), w_ref[...],
                  preferred_element_type=jnp.float32)       # (nb*H, NW) f32

    # per-output-channel |W| scaling applied post-accumulation in f32
    acc = acc * wscale_ref[...]

    # shortcut: scale*x added to both Cin-wide halves of the 128-lane output row
    # (lane concat of two 64-lane copies; cheap relative to the matmul/DMA).
    sc = (x * scale_ref[0, 0]).reshape(nb * H, KW)
    acc = acc + jnp.concatenate([sc, sc], axis=-1)

    out_ref[...] = acc.reshape(nb, H, NW).astype(out_ref.dtype)


# ------------------------------ Host wrapper -------------------------------- #

def _pick_batch_block(N, H, KW, NW):
    """Largest divisor of N whose per-step footprint hits the sweet spot:
    nb*H >= 256 rows for the MXU M dim, ~1 MiB of HBM traffic per grid step,
    and a comfortable VMEM working set; keep >= 2 grid steps (v7x megacore)
    whenever that does not starve the MXU."""
    hbm_per_b = H * (KW + NW) * 4                         # f32 in + out, bytes
    vmem_per_b = 2 * hbm_per_b + H * 3 * KW * 2           # dbl-buffered io + im2col
    target = max(1, (1 << 20) // hbm_per_b)               # ~1 MiB HBM per step
    target = max(target, -(-256 // H))                    # nb*H >= 256 if possible
    target = min(target, max(1, (24 << 20) // vmem_per_b))  # VMEM budget (v7x-safe)
    divisors = [d for d in range(1, N + 1) if N % d == 0]
    nb = max([d for d in divisors if d <= target], default=1)
    if N // nb < 2:                                        # prefer >= 2 grid steps
        smaller = [d for d in divisors if d < nb and N // d >= 2]
        if smaller and smaller[-1] * H >= 256:
            nb = smaller[-1]
    return nb


def binary_block_transpose(x_nchw, b11, alpha, b12, scale, w_oihw, *,
                           batch_block=None):
    """x_nchw: (N, Cin, H, W); w_oihw: (2*Cin, Cin, 3, 3). Returns NCHW output
    of shape (N, Cin//2, 2H, 2W) (PixelShuffle(2) applied)."""
    N, Cin, H, W = x_nchw.shape
    Cout = w_oihw.shape[0]
    assert Cout == 2 * Cin and Cout % 4 == 0 and W >= 3 and H >= 2
    KW, NW = Cin * W, Cout * W

    # ---- one-time parameter prep (host-side glue) ---------------------------
    # HardBinaryConv per-output-channel scaling (applied in-kernel, in f32)
    scaling = jnp.mean(jnp.abs(w_oihw), axis=(1, 2, 3))                  # (Cout,)
    wscale_row = jnp.repeat(scaling, W).reshape(1, NW).astype(jnp.float32)

    # Fold sign(W), the kw taps and the W-direction zero padding into 3
    # block-banded matrices (one per kh tap), then stack them along K in
    # im2col order ([row h-1 | row h | row h+1]):
    #   BigW[kh][ci*W + w', co*W + w] = sign(W)[co, ci, kh, w'-w+1]  (else 0)
    sgn_t = jnp.transpose(jnp.sign(w_oihw), (1, 0, 2, 3))                # (Cin,Cout,3,3)
    shifts = jnp.stack([jnp.eye(W, k=1, dtype=jnp.float32),
                        jnp.eye(W, dtype=jnp.float32),
                        jnp.eye(W, k=-1, dtype=jnp.float32)])            # (3, W, W)
    w_planar = jnp.einsum('cokq,qpw->kcpow', sgn_t, shifts)
    w_big = w_planar.reshape(3 * KW, NW).astype(jnp.bfloat16)            # exact ±1/0

    # per-channel params tiled to the row-planar lane layout (index = ci*W + w)
    def planar_row(p):
        return jnp.repeat(p.reshape(Cin).astype(jnp.float32), W).reshape(1, KW)

    b11_row = planar_row(b11)
    alpha_row = planar_row(alpha)
    b12_row = planar_row(b12)
    scale_s = scale.reshape(1, 1).astype(jnp.float32)

    # ---- input: NCHW -> row-planar (N, H, Cin*W) -----------------------------
    x_planar = jnp.transpose(x_nchw, (0, 2, 1, 3)).reshape(N, H, KW)
    x_planar = x_planar.astype(jnp.float32)

    # ---- batch blocking ------------------------------------------------------
    nb = _pick_batch_block(N, H, KW, NW) if batch_block is None else batch_block
    assert N % nb == 0

    # ---- explicit VMEM budget (v7x: 64 MiB physical / 32 MiB scoped default) --
    x_blk = nb * H * KW * 4
    out_blk = nb * H * NW * 4
    im_blk = nb * H * 3 * KW * 2
    w_bytes = 3 * KW * NW * 2
    vmem_est = 2 * (x_blk + out_blk) + im_blk + 2 * w_bytes + (2 << 20)
    vmem_limit = int(min(max(vmem_est, 16 << 20), 48 << 20))

    grid_spec = pltpu.PrefetchScalarGridSpec(
        num_scalar_prefetch=0,
        grid=(N // nb,),
        in_specs=[
            pl.BlockSpec((nb, H, KW), lambda i: (i, 0, 0)),
            pl.BlockSpec((1, KW), lambda i: (0, 0)),
            pl.BlockSpec((1, KW), lambda i: (0, 0)),
            pl.BlockSpec((1, KW), lambda i: (0, 0)),
            pl.BlockSpec((1, NW), lambda i: (0, 0)),
            pl.BlockSpec(memory_space=pltpu.MemorySpace.SMEM),   # scalar scale
            pl.BlockSpec((3 * KW, NW), lambda i: (0, 0)),
        ],
        out_specs=pl.BlockSpec((nb, H, NW), lambda i: (i, 0, 0)),
        scratch_shapes=[pltpu.VMEM((nb, H, 3 * KW), jnp.bfloat16)],
    )

    out_planar = pl.pallas_call(
        binary_block_kernel,
        out_shape=jax.ShapeDtypeStruct((N, H, NW), jnp.float32),
        grid_spec=grid_spec,
        compiler_params=pltpu.CompilerParams(
            dimension_semantics=("parallel",),     # batch axis -> v7x megacore
            vmem_limit_bytes=vmem_limit),
    )(x_planar, b11_row, alpha_row, b12_row, wscale_row, scale_s, w_big)

    # ---- fused PixelShuffle(2): row-planar -> NCHW with a single transpose ----
    # out_planar[n, h, co*W + w] = Y[n, co, h, w];  final[n,c,2h+i,2w+j] = Y[n,4c+2i+j,h,w]
    r = 2
    c_fin = Cout // (r * r)
    out6 = out_planar.reshape(N, H, c_fin, r, r, W)
    out = jnp.transpose(out6, (0, 2, 1, 3, 5, 4)).reshape(N, c_fin, H * r, W * r)
    return out


# --------------------------- Pure-JAX reference ------------------------------ #

def pixel_shuffle_nchw(x, r):
    # torch.nn.PixelShuffle semantics on NCHW
    n, crr, h, w = x.shape
    c = crr // (r * r)
    x = x.reshape(n, c, r, r, h, w)
    x = jnp.transpose(x, (0, 1, 4, 2, 5, 3))
    return x.reshape(n, c, h * r, w * r)


def reference_forward(x, b11, alpha, b12, scale, w_oihw):
    b11r = b11.reshape(1, -1, 1, 1)
    ar = alpha.reshape(1, -1, 1, 1)
    b12r = b12.reshape(1, -1, 1, 1)
    out = x + b11r
    out = jnp.where(out >= 0, out, ar * out)
    out = out + b12r
    out = jnp.sign(out)
    scaling = jnp.mean(jnp.abs(w_oihw), axis=(1, 2, 3), keepdims=True)
    bw = scaling * jnp.sign(w_oihw)
    y = jax.lax.conv_general_dilated(
        out, bw, window_strides=(1, 1), padding=((1, 1), (1, 1)),
        dimension_numbers=("NCHW", "OIHW", "NCHW"))
    shortcut = x * scale.reshape(())
    shortcut = jnp.concatenate([shortcut, shortcut], axis=1)
    return pixel_shuffle_nchw(y + shortcut, 2)


# ---------------------------------- Main ------------------------------------ #

if __name__ == "__main__":
    key = jax.random.PRNGKey(0)
    k1, k2, k3, k4 = jax.random.split(key, 4)

    N, inplanes, H, W = 2, 4, 16, 16
    planes = inplanes // 2
    Cout = inplanes * 2

    x = jax.random.normal(k1, (N, inplanes, H, W), jnp.float32)

    # Deterministic synthetic parameters (shapes follow the module's __init__;
    # values chosen non-trivially so bias/scale/sign paths are exercised).
    b11 = 0.1 * jax.random.normal(k2, (inplanes,), jnp.float32)        # move11 bias
    b12 = 0.1 * jax.random.normal(k3, (inplanes,), jnp.float32)        # move12 bias
    alpha = jnp.full((inplanes,), 0.25, jnp.float32)                   # PReLU init
    scale = jnp.full((1, 1, 1, 1), 1.3, jnp.float32)                   # LearnableScale
    w = (jax.random.uniform(k4, (Cout, inplanes, 3, 3), jnp.float32) - 0.5) * 0.002

    out = binary_block_transpose(x, b11, alpha, b12, scale, w)
    out = jax.block_until_ready(out)

    assert out.shape == (N, planes, 2 * H, 2 * W)
    ref = reference_forward(x, b11, alpha, b12, scale, w)
    np.testing.assert_allclose(np.asarray(out), np.asarray(ref), rtol=1e-4, atol=1e-4)
    print("KERNEL_OK")
</pallas_src>

<mosaic_0001>
module attributes {stable_mosaic.version = 11 : i64} {
  func.func @binary_block_kernel(%arg0: i32, %arg1: memref<2x16x64xf32, #tpu.memory_space<vmem>>, %arg2: memref<1x64xf32, #tpu.memory_space<vmem>>, %arg3: memref<1x64xf32, #tpu.memory_space<vmem>>, %arg4: memref<1x64xf32, #tpu.memory_space<vmem>>, %arg5: memref<1x128xf32, #tpu.memory_space<vmem>>, %arg6: memref<1x1xf32, #tpu.memory_space<smem>>, %arg7: memref<192x128xbf16, #tpu.memory_space<vmem>>, %arg8: memref<2x16x128xf32, #tpu.memory_space<vmem>>, %arg9: memref<2x16x192xbf16, #tpu.memory_space<vmem>>) attributes {dimension_semantics = [#tpu.dimension_semantics<parallel>], iteration_bounds = array<i64: 1>, scalar_prefetch = 0 : i64, scratch_operands = 1 : i64, tpu.core_type = #tpu.core_type<tc>, window_params = [{transform_indices = @transform_0, window_bounds = array<i64: 2, 16, 64>}, {pipeline_mode = #tpu.pipeline_mode<synchronous>, transform_indices = @transform_1, window_bounds = array<i64: 1, 64>}, {pipeline_mode = #tpu.pipeline_mode<synchronous>, transform_indices = @transform_2, window_bounds = array<i64: 1, 64>}, {pipeline_mode = #tpu.pipeline_mode<synchronous>, transform_indices = @transform_3, window_bounds = array<i64: 1, 64>}, {pipeline_mode = #tpu.pipeline_mode<synchronous>, transform_indices = @transform_4, window_bounds = array<i64: 1, 128>}, {transform_indices = @transform_5, window_bounds = array<i64: 1, 1>}, {pipeline_mode = #tpu.pipeline_mode<synchronous>, transform_indices = @transform_6, window_bounds = array<i64: 192, 128>}, {transform_indices = @transform_7, window_bounds = array<i64: 2, 16, 128>}]} {
    %c0 = arith.constant 0 : index
    %c0_0 = arith.constant 0 : index
    %c0_1 = arith.constant 0 : index
    %0 = vector.load %arg1[%c0, %c0_0, %c0_1] : memref<2x16x64xf32, #tpu.memory_space<vmem>>, vector<2x16x64xf32>
    %c0_2 = arith.constant 0 : index
    %c0_3 = arith.constant 0 : index
    %1 = vector.load %arg2[%c0_2, %c0_3] : memref<1x64xf32, #tpu.memory_space<vmem>>, vector<1x64xf32>
    %2 = vector.shape_cast %1 : vector<1x64xf32> to vector<1x1x64xf32>
    %3 = vector.broadcast %2 : vector<1x1x64xf32> to vector<2x16x64xf32>
    %4 = arith.addf %0, %3 : vector<2x16x64xf32>
    %cst = arith.constant 0.000000e+00 : f32
    %5 = vector.broadcast %cst : f32 to vector<2x16x64xf32>
    %6 = arith.cmpf oge, %4, %5 : vector<2x16x64xf32>
    %c0_4 = arith.constant 0 : index
    %c0_5 = arith.constant 0 : index
    %7 = vector.load %arg3[%c0_4, %c0_5] : memref<1x64xf32, #tpu.memory_space<vmem>>, vector<1x64xf32>
    %8 = vector.shape_cast %7 : vector<1x64xf32> to vector<1x1x64xf32>
    %9 = vector.broadcast %8 : vector<1x1x64xf32> to vector<2x16x64xf32>
    %10 = arith.mulf %9, %4 : vector<2x16x64xf32>
    %11 = arith.select %6, %4, %10 : vector<2x16x64xi1>, vector<2x16x64xf32>
    %c0_6 = arith.constant 0 : index
    %c0_7 = arith.constant 0 : index
    %12 = vector.load %arg4[%c0_6, %c0_7] : memref<1x64xf32, #tpu.memory_space<vmem>>, vector<1x64xf32>
    %13 = vector.shape_cast %12 : vector<1x64xf32> to vector<1x1x64xf32>
    %14 = vector.broadcast %13 : vector<1x1x64xf32> to vector<2x16x64xf32>
    %15 = arith.addf %11, %14 : vector<2x16x64xf32>
    %cst_8 = arith.constant 0.000000e+00 : f32
    %16 = vector.broadcast %cst_8 : f32 to vector<2x16x64xf32>
    %17 = arith.cmpf ogt, %15, %16 : vector<2x16x64xf32>
    %cst_9 = arith.constant 0.000000e+00 : f32
    %18 = vector.broadcast %cst_9 : f32 to vector<2x16x64xf32>
    %19 = arith.cmpf olt, %15, %18 : vector<2x16x64xf32>
    %cst_10 = arith.constant -1.000000e+00 : f32
    %cst_11 = arith.constant 0.000000e+00 : f32
    %20 = vector.broadcast %cst_10 : f32 to vector<2x16x64xf32>
    %21 = vector.broadcast %cst_11 : f32 to vector<2x16x64xf32>
    %22 = arith.select %19, %20, %21 : vector<2x16x64xi1>, vector<2x16x64xf32>
    %cst_12 = arith.constant 1.000000e+00 : f32
    %23 = vector.broadcast %cst_12 : f32 to vector<2x16x64xf32>
    %24 = arith.select %17, %23, %22 : vector<2x16x64xi1>, vector<2x16x64xf32>
    %25 = arith.truncf %24 : vector<2x16x64xf32> to vector<2x16x64xbf16>
    %cst_13 = arith.constant 0.000000e+00 : bf16
    %26 = vector.broadcast %cst_13 : bf16 to vector<2x1x64xbf16>
    %c0_14 = arith.constant 0 : index
    %c0_15 = arith.constant 0 : index
    %c0_16 = arith.constant 0 : index
    %27 = vector.load %arg9[%c0_14, %c0_15, %c0_16] : memref<2x16x192xbf16, #tpu.memory_space<vmem>>, vector<2x1x64xbf16>
    tpu.vector_store %arg9[%c0_14, %c0_15, %c0_16], %26 {strides = array<i32>} : memref<2x16x192xbf16, #tpu.memory_space<vmem>>, vector<2x1x64xbf16>,
    %28 = vector.extract_strided_slice %25 {offsets = [0, 0, 0], sizes = [2, 15, 64], strides = [1, 1, 1]} : vector<2x16x64xbf16> to vector<2x15x64xbf16>
    %c0_17 = arith.constant 0 : index
    %c1 = arith.constant 1 : index
    %c0_18 = arith.constant 0 : index
    %29 = vector.load %arg9[%c0_17, %c1, %c0_18] : memref<2x16x192xbf16, #tpu.memory_space<vmem>>, vector<2x15x64xbf16>
    tpu.vector_store %arg9[%c0_17, %c1, %c0_18], %28 {strides = array<i32>} : memref<2x16x192xbf16, #tpu.memory_space<vmem>>, vector<2x15x64xbf16>,
    %c0_19 = arith.constant 0 : index
    %c0_20 = arith.constant 0 : index
    %c64 = arith.constant 64 : index
    %30 = vector.load %arg9[%c0_19, %c0_20, %c64] : memref<2x16x192xbf16, #tpu.memory_space<vmem>>, vector<2x16x64xbf16>
    tpu.vector_store %arg9[%c0_19, %c0_20, %c64], %25 {strides = array<i32>} : memref<2x16x192xbf16, #tpu.memory_space<vmem>>, vector<2x16x64xbf16>,
    %31 = vector.extract_strided_slice %25 {offsets = [0, 1, 0], sizes = [2, 15, 64], strides = [1, 1, 1]} : vector<2x16x64xbf16> to vector<2x15x64xbf16>
    %c0_21 = arith.constant 0 : index
    %c0_22 = arith.constant 0 : index
    %c128 = arith.constant 128 : index
    %32 = vector.load %arg9[%c0_21, %c0_22, %c128] : memref<2x16x192xbf16, #tpu.memory_space<vmem>>, vector<2x15x64xbf16>
    tpu.vector_store %arg9[%c0_21, %c0_22, %c128], %31 {strides = array<i32>} : memref<2x16x192xbf16, #tpu.memory_space<vmem>>, vector<2x15x64xbf16>,
    %c0_23 = arith.constant 0 : index
    %c15 = arith.constant 15 : index
    %c128_24 = arith.constant 128 : index
    %33 = vector.load %arg9[%c0_23, %c15, %c128_24] : memref<2x16x192xbf16, #tpu.memory_space<vmem>>, vector<2x1x64xbf16>
    tpu.vector_store %arg9[%c0_23, %c15, %c128_24], %26 {strides = array<i32>} : memref<2x16x192xbf16, #tpu.memory_space<vmem>>, vector<2x1x64xbf16>,
    %c0_25 = arith.constant 0 : index
    %c0_26 = arith.constant 0 : index
    %c0_27 = arith.constant 0 : index
    %34 = vector.load %arg9[%c0_25, %c0_26, %c0_27] : memref<2x16x192xbf16, #tpu.memory_space<vmem>>, vector<2x16x192xbf16>
    %35 = vector.shape_cast %34 : vector<2x16x192xbf16> to vector<32x192xbf16>
    %c0_28 = arith.constant 0 : index
    %c0_29 = arith.constant 0 : index
    %36 = vector.load %arg7[%c0_28, %c0_29] : memref<192x128xbf16, #tpu.memory_space<vmem>>, vector<192x128xbf16>
    %cst_30 = arith.constant dense<0.000000e+00> : vector<32x128xf32>
    %37 = tpu.matmul %35, %36, %cst_30 {dimension_numbers = #tpu.dot_dimension_numbers<[1], [0], [0], [1], [0, 0, 1, 1], [], []>} : vector<32x192xbf16>, vector<192x128xbf16>, vector<32x128xf32> -> vector<32x128xf32>
    %c0_31 = arith.constant 0 : index
    %c0_32 = arith.constant 0 : index
    %38 = vector.load %arg5[%c0_31, %c0_32] : memref<1x128xf32, #tpu.memory_space<vmem>>, vector<1x128xf32>
    %39 = vector.broadcast %38 : vector<1x128xf32> to vector<32x128xf32>
    %40 = arith.mulf %37, %39 : vector<32x128xf32>
    %c0_33 = arith.constant 0 : index
    %c0_34 = arith.constant 0 : index
    %41 = memref.load %arg6[%c0_33, %c0_34] : memref<1x1xf32, #tpu.memory_space<smem>>
    %42 = vector.broadcast %41 : f32 to vector<2x16x64xf32>
    %43 = arith.mulf %0, %42 : vector<2x16x64xf32>
    %44 = vector.shape_cast %43 : vector<2x16x64xf32> to vector<32x64xf32>
    %45 = tpu.concatenate %44, %44 in 1 : vector<32x64xf32>, vector<32x64xf32> -> vector<32x128xf32>
    %46 = arith.addf %40, %45 : vector<32x128xf32>
    %47 = vector.shape_cast %46 : vector<32x128xf32> to vector<2x16x128xf32>
    %c0_35 = arith.constant 0 : index
    %c0_36 = arith.constant 0 : index
    %c0_37 = arith.constant 0 : index
    %48 = vector.load %arg8[%c0_35, %c0_36, %c0_37] : memref<2x16x128xf32, #tpu.memory_space<vmem>>, vector<2x16x128xf32>
    tpu.vector_store %arg8[%c0_35, %c0_36, %c0_37], %47 {strides = array<i32>} : memref<2x16x128xf32, #tpu.memory_space<vmem>>, vector<2x16x128xf32>,
    return
  }
  func.func @transform_0(%arg0: i32) -> (i32, i32, i32) {
    %c0_i32 = arith.constant 0 : i32
    %c0_i32_0 = arith.constant 0 : i32
    %c0_i32_1 = arith.constant 0 : i32
    return %arg0, %c0_i32, %c0_i32_0 : i32, i32, i32
  }
  func.func @transform_1(%arg0: i32) -> (i32, i32) {
    %c0_i32 = arith.constant 0 : i32
    %c0_i32_0 = arith.constant 0 : i32
    %c0_i32_1 = arith.constant 0 : i32
    return %c0_i32, %c0_i32_0 : i32, i32
  }
  func.func @transform_2(%arg0: i32) -> (i32, i32) {
    %c0_i32 = arith.constant 0 : i32
    %c0_i32_0 = arith.constant 0 : i32
    %c0_i32_1 = arith.constant 0 : i32
    return %c0_i32, %c0_i32_0 : i32, i32
  }
  func.func @transform_3(%arg0: i32) -> (i32, i32) {
    %c0_i32 = arith.constant 0 : i32
    %c0_i32_0 = arith.constant 0 : i32
    %c0_i32_1 = arith.constant 0 : i32
    return %c0_i32, %c0_i32_0 : i32, i32
  }
  func.func @transform_4(%arg0: i32) -> (i32, i32) {
    %c0_i32 = arith.constant 0 : i32
    %c0_i32_0 = arith.constant 0 : i32
    %c0_i32_1 = arith.constant 0 : i32
    return %c0_i32, %c0_i32_0 : i32, i32
  }
  func.func @transform_5(%arg0: i32) -> (i32, i32) {
    %c0_i32 = arith.constant 0 : i32
    %c0_i32_0 = arith.constant 0 : i32
    %c0_i32_1 = arith.constant 0 : i32
    return %c0_i32, %c0_i32_0 : i32, i32
  }
  func.func @transform_6(%arg0: i32) -> (i32, i32) {
    %c0_i32 = arith.constant 0 : i32
    %c0_i32_0 = arith.constant 0 : i32
    %c0_i32_1 = arith.constant 0 : i32
    return %c0_i32, %c0_i32_0 : i32, i32
  }
  func.func @transform_7(%arg0: i32) -> (i32, i32, i32) {
    %c0_i32 = arith.constant 0 : i32
    %c0_i32_0 = arith.constant 0 : i32
    %c0_i32_1 = arith.constant 0 : i32
    return %arg0, %c0_i32, %c0_i32_0 : i32, i32, i32
  }
}

</mosaic_0001>

<llo_original>
// kernel: tpu_custom_call.1
$region0: #{tpu_custom_call.1}
  #allocation0 [shape = 'u32[]', space=smem, size = 0x4, offset = 0x4, fixed_abs, tag = 'smem constant byte address 0x4 - core index']
  #allocation1 [shape = 'u32[144,128]{1,0:T(1,128)}', space=vmem, size = 0x12000, scoped, tag = 'internal scratch']
  #allocation2 [shape = 'bf16[2,16,192]{2,1,0:T(8,128)(2,1)}', space=vmem, size = 0x4000, scoped, tag = 'scratch operand']
  #allocation3 [shape = 'f32[1,1]{1,0:T(1,128)S(6)}', space=smem, size = 0x200, scoped, tag = 'scoped memory for tpu_custom_call.1']
  %s0 = inlined_call_operand.hbm [shape: f32[2,16,64], index: 0, kind: input, shape index: {}]
  %s1 = inlined_call_operand.vmem [shape: f32[1,64], index: 1, kind: input, shape index: {}]
  %s2 = inlined_call_operand.vmem [shape: f32[1,64], index: 2, kind: input, shape index: {}]
  %s3 = inlined_call_operand.vmem [shape: f32[1,64], index: 3, kind: input, shape index: {}]
  %s4 = inlined_call_operand.vmem [shape: f32[1,128], index: 4, kind: input, shape index: {}]
  %s5 = inlined_call_operand.<no memory space> [shape: f32[1,1], index: 5, kind: input, shape index: {}]
  %s6 = inlined_call_operand.hbm [shape: bf16[192,128], index: 6, kind: input, shape index: {}]
  %s7 = inlined_call_operand.hbm [shape: f32[2,16,128], index: 7, kind: output, shape index: {}]
  %s8 = sld [smem:[#allocation0]]
  $region46: #{tpu_custom_call.1} parent=0
    _
  %s10 = ssub.s32 1, %s8
  %s11 = scalar_select 0, %s10, %s8
  %12 = sst [smem:[#allocation3]] %s5
  $region1: #{tpu_custom_call.1} parent=0
    #allocation4 [shape = 'u8[16384]{0}', space=vmem, size = 0x4000, scoped, tag = 'input window, operand 0, single buffered']
    #allocation5 [shape = 's32[1]{0}', space=sflag, size = 0x4, scoped, tag = 'scoped memory for tpu_custom_call.1']
    #allocation6 [shape = 's32[1]{0}', space=sflag, size = 0x4, scoped, tag = 'scoped memory for tpu_custom_call.1']
    #allocation7 [shape = 'u8[49152]{0}', space=vmem, size = 0xc000, scoped, tag = 'input window, operand 6, single buffered']
    #allocation8 [shape = 's32[1]{0}', space=sflag, size = 0x4, scoped, tag = 'scoped memory for tpu_custom_call.1']
    #allocation9 [shape = 'u8[16384]{0}', space=vmem, size = 0x4000, scoped, tag = 'output window, operand 0, single buffered']
    %13 = vsyncpa [#allocation5], 0
    %14 = vsyncpa [#allocation8], 0
    %15 = vsyncpa [#allocation6], 0
    // Predicated region
    $region2: #{tpu_custom_call.1} parent=1 // pred_check
      _
    $region3: #{tpu_custom_call.1} parent=1 // pred_check_branch
      %17 = sbr.rel (0) target = $region5
    $region4: #{tpu_custom_call.1} parent=1 // pred_region
      %s19 = ssub.s32 512, 512
      %20 = vsyncadd [#allocation5], %s19
      %s21 = sshll.u32 [#allocation4], 4
      %s22 = int_to_ptr.vmem [resolvable:$true] %s21
      %27 = dma.hbm_to_vmem [thread:$0]  %s0, 512, %s22, [#allocation5], 128, 128, 8
    $region5: #{tpu_custom_call.1} parent=1 // pred_fallthru
      _
    // Predicated region
    $region6: #{tpu_custom_call.1} parent=1 // pred_check
      _
    $region7: #{tpu_custom_call.1} parent=1 // pred_check_branch
      %29 = sbr.rel (0) target = $region9
    $region8: #{tpu_custom_call.1} parent=1 // pred_region
      _
    $region9: #{tpu_custom_call.1} parent=1 // pred_fallthru
      _
    // Predicated region
    $region10: #{tpu_custom_call.1} parent=1 // pred_check
      _
    $region11: #{tpu_custom_call.1} parent=1 // pred_check_branch
      %31 = sbr.rel (0) target = $region13
    $region12: #{tpu_custom_call.1} parent=1 // pred_region
      _
    $region13: #{tpu_custom_call.1} parent=1 // pred_fallthru
      _
    // Predicated region
    $region14: #{tpu_custom_call.1} parent=1 // pred_check
      _
    $region15: #{tpu_custom_call.1} parent=1 // pred_check_branch
      %33 = sbr.rel (0) target = $region17
    $region16: #{tpu_custom_call.1} parent=1 // pred_region
      _
    $region17: #{tpu_custom_call.1} parent=1 // pred_fallthru
      _
    // Predicated region
    $region18: #{tpu_custom_call.1} parent=1 // pred_check
      _
    $region19: #{tpu_custom_call.1} parent=1 // pred_check_branch
      %35 = sbr.rel (0) target = $region21
    $region20: #{tpu_custom_call.1} parent=1 // pred_region
      _
    $region21: #{tpu_custom_call.1} parent=1 // pred_fallthru
      _
    // Predicated region
    $region22: #{tpu_custom_call.1} parent=1 // pred_check
      _
    $region23: #{tpu_custom_call.1} parent=1 // pred_check_branch
      %37 = sbr.rel (0) target = $region25
    $region24: #{tpu_custom_call.1} parent=1 // pred_region
      _
    $region25: #{tpu_custom_call.1} parent=1 // pred_fallthru
      _
    // Predicated region
    $region26: #{tpu_custom_call.1} parent=1 // pred_check
      _
    $region27: #{tpu_custom_call.1} parent=1 // pred_check_branch
      %39 = sbr.rel (0) target = $region29
    $region28: #{tpu_custom_call.1} parent=1 // pred_region
      %s41 = ssub.s32 1536, 1536
      %42 = vsyncadd [#allocation8], %s41
      %s43 = sshll.u32 [#allocation7], 4
      %s44 = int_to_ptr.vmem [resolvable:$true] %s43
      %49 = dma.hbm_to_vmem [thread:$0]  %s6, 1536, %s44, [#allocation8], 64, 64, 4
    $region29: #{tpu_custom_call.1} parent=1 // pred_fallthru
      _
    // Predicated region
    $region30: #{tpu_custom_call.1} parent=1 // pred_check
      _
    $region31: #{tpu_custom_call.1} parent=1 // pred_check_branch
      %51 = sbr.rel (0) target = $region33
    $region32: #{tpu_custom_call.1} parent=1 // pred_region
      %52 = dma.done [#allocation5], 512
    $region33: #{tpu_custom_call.1} parent=1 // pred_fallthru
      _
    // Predicated region
    $region34: #{tpu_custom_call.1} parent=1 // pred_check
      _
    $region35: #{tpu_custom_call.1} parent=1 // pred_check_branch
      %54 = sbr.rel (0) target = $region37
    $region36: #{tpu_custom_call.1} parent=1 // pred_region
      %55 = dma.done [#allocation8], 1536
    $region37: #{tpu_custom_call.1} parent=1 // pred_fallthru
      _
    %v57 = vld [vmem:[#allocation4] sm:$0xff]
    %v58 = vld [vmem:[#allocation4 + $0x8] sm:$0xff]
    %v59 = vld [vmem:[#allocation4 + $0x10] sm:$0xff]
    %v60 = vld [vmem:[#allocation4 + $0x18] sm:$0xff]
    %v61 = vld [vmem:[%s1] sm:$0x1]
    %v63 = vlaneseq
    %v64 = vshrl.u32 %v63, 7
    %v65 = vsub.s32 0, %v64
    %v66 = vrot.slane %v61, %v65
    %v68 = vadd.f32 %v57, %v66
    %v69 = vadd.f32 %v58, %v66
    %v70 = vadd.f32 %v59, %v66
    %v71 = vadd.f32 %v60, %v66
    %vm72 = vcmp.ge.f32.partialorder %v68, 0.0
    %vm73 = vcmp.ge.f32.partialorder %v69, 0.0
    %vm74 = vcmp.ge.f32.partialorder %v70, 0.0
    %vm75 = vcmp.ge.f32.partialorder %v71, 0.0
    %v76 = vld [vmem:[%s2] sm:$0x1]
    %v78 = vlaneseq
    %v79 = vshrl.u32 %v78, 7
    %v80 = vsub.s32 0, %v79
    %v81 = vrot.slane %v76, %v80
    %v83 = vmul.f32 %v81, %v68
    %v84 = vmul.f32 %v81, %v69
    %v85 = vmul.f32 %v81, %v70
    %v86 = vmul.f32 %v81, %v71
    %v87 = vsel %vm72, %v68, %v83
    %v88 = vsel %vm73, %v69, %v84
    %v89 = vsel %vm74, %v70, %v85
    %v90 = vsel %vm75, %v71, %v86
    %v91 = vld [vmem:[%s3] sm:$0x1]
    %v93 = vlaneseq
    %v94 = vshrl.u32 %v93, 7
    %v95 = vsub.s32 0, %v94
    %v96 = vrot.slane %v91, %v95
    %v98 = vadd.f32 %v87, %v96
    %v99 = vadd.f32 %v88, %v96
    %v100 = vadd.f32 %v89, %v96
    %v101 = vadd.f32 %v90, %v96
    %vm102 = vcmp.gt.f32.partialorder %v98, 0.0
    %vm103 = vcmp.gt.f32.partialorder %v99, 0.0
    %vm104 = vcmp.gt.f32.partialorder %v100, 0.0
    %vm105 = vcmp.gt.f32.partialorder %v101, 0.0
    %vm106 = vcmp.lt.f32.partialorder %v98, 0.0
    %vm107 = vcmp.lt.f32.partialorder %v99, 0.0
    %vm108 = vcmp.lt.f32.partialorder %v100, 0.0
    %vm109 = vcmp.lt.f32.partialorder %v101, 0.0
    %v110 = vsel %vm106, -1.0, 0.0
    %v111 = vsel %vm107, -1.0, 0.0
    %v112 = vsel %vm108, -1.0, 0.0
    %v113 = vsel %vm109, -1.0, 0.0
    %v114 = vsel %vm102, 1.0, %v110
    %v115 = vsel %vm103, 1.0, %v111
    %v116 = vsel %vm104, 1.0, %v112
    %v117 = vsel %vm105, 1.0, %v113
    %v118 = vpack.c.bf16 %v115, %v114
    %v119 = vpack.c.bf16 %v117, %v116
    %vm120 = vcmask 516096
    %vm121 = vsmask.f32 256
    %vm122 = vmand %vm120, %vm121
    %v123 = vld [vmem:[#allocation2] sm:$0x1]
    %v124 = vsel %vm122, 0, %v123
    %125 = vst [vmem:[#allocation2] sm:$0x1] %v124
    %v126 = vld [vmem:[#allocation2 + $0x10] sm:$0x1]
    %v127 = vsel %vm122, 0, %v126
    %128 = vst [vmem:[#allocation2 + $0x10] sm:$0x1] %v127
    %v131 = vunpack.c.l.b16 %v118
    %v132 = vunpack.c.h.b16 %v118
    %v133 = vunpack.c.l.b16 %v119
    %v134 = vunpack.c.h.b16 %v119
    %v135 = vpack.c.b16 %v131, %v131
    %v136 = vpack.c.b16 %v132, %v132
    %v137 = vpack.c.b16 %v133, %v133
    %v138 = vpack.c.b16 %v134, %v134
    %vm139 = vsmask.f32 4368
    %vm140 = vmor %vm121, %vm139
    %v142 = vshrl.u32 %v135, 16
    %v144 = vrot.slane %v142, 7
    %v145 = vshll.u32 %v135, 16
    %v147 = vor.u32 %v144, %v145
    %v148 = vrot.slane %v144, 4
    %v150 = vshrl.u32 %v136, 16
    %v152 = vrot.slane %v150, 7
    %v153 = vshll.u32 %v136, 16
    %v155 = vor.u32 %v152, %v153
    %v156 = vsel %vm140, %v148, %v155
    %v158 = vshrl.u32 %v137, 16
    %v160 = vrot.slane %v158, 7
    %v161 = vshll.u32 %v137, 16
    %v163 = vor.u32 %v160, %v161
    %v164 = vrot.slane %v160, 4
    %v166 = vshrl.u32 %v138, 16
    %v168 = vrot.slane %v166, 7
    %v169 = vshll.u32 %v138, 16
    %v171 = vor.u32 %v168, %v169
    %v172 = vsel %vm140, %v164, %v171
    %vm177 = vcmask 519168
    %vm178 = vsmask.f32 7938
    %vm179 = vmand %vm177, %vm178
    %v180 = vld [vmem:[#allocation2] sm:$0xf]
    %v181 = vsel %vm179, %v147, %v180
    %182 = vst [vmem:[#allocation2] sm:$0xf] %v181
    %vm183 = vcmask 519168
    %184 = vst.msk [vmem:[#allocation2 + $0x8] sm:$0xf] %vm183, %v156
    %v185 = vld [vmem:[#allocation2 + $0x10] sm:$0xf]
    %v186 = vsel %vm179, %v163, %v185
    %187 = vst [vmem:[#allocation2 + $0x10] sm:$0xf] %v186
    %188 = vst.msk [vmem:[#allocation2 + $0x18] sm:$0xf] %vm183, %v172
    %189 = vrot.lane.b32.xlu0 %v135, 64
    %v190 = vpop.permute.xlu0 %189
    %191 = vrot.lane.b32.xlu0 %v136, 64
    %v192 = vpop.permute.xlu0 %191
    %193 = vrot.lane.b32.xlu0 %v137, 64
    %v194 = vpop.permute.xlu0 %193
    %195 = vrot.lane.b32.xlu0 %v138, 64
    %v196 = vpop.permute.xlu0 %195
    %vm201 = vcmask 1043968
    %202 = vst.msk [vmem:[#allocation2] sm:$0xf] %vm201, %v190
    %203 = vst.msk [vmem:[#allocation2 + $0x8] sm:$0xf] %vm201, %v192
    %204 = vst.msk [vmem:[#allocation2 + $0x10] sm:$0xf] %vm201, %v194
    %205 = vst.msk [vmem:[#allocation2 + $0x18] sm:$0xf] %vm201, %v196
    %vm206 = vsmask.f32 3328
    %vm207 = vsmask.f32 7440
    %vm208 = vmor %vm206, %vm207
    %v209 = vrot.slane %v142, 4
    %v210 = vrot.slane %v145, 5
    %v211 = vor.u32 %v209, %v210
    %v212 = vrot.slane %v211, 4
    %v213 = vrot.slane %v153, 5
    %v214 = vsel %vm208, %v212, %v213
    %v215 = vrot.slane %v150, 4
    %v216 = vor.u32 %v215, %v213
    %v217 = vrot.slane %v216, 4
    %v218 = vrot.slane %v158, 4
    %v219 = vrot.slane %v161, 5
    %v220 = vor.u32 %v218, %v219
    %v221 = vrot.slane %v220, 4
    %v222 = vrot.slane %v169, 5
    %v223 = vsel %vm208, %v221, %v222
    %v224 = vrot.slane %v166, 4
    %v225 = vor.u32 %v224, %v222
    %v226 = vrot.slane %v225, 4
    %231 = vst.msk [vmem:[#allocation2 + $0x4] sm:$0xf] %vm183, %v214
    %vm232 = vmand %vm177, %vm206
    %v233 = vld [vmem:[#allocation2 + $0xc] sm:$0xf]
    %v234 = vsel %vm232, %v217, %v233
    %235 = vst [vmem:[#allocation2 + $0xc] sm:$0xf] %v234
    %236 = vst.msk [vmem:[#allocation2 + $0x14] sm:$0xf] %vm183, %v223
    %v237 = vld [vmem:[#allocation2 + $0x1c] sm:$0xf]
    %v238 = vsel %vm232, %v226, %v237
    %239 = vst [vmem:[#allocation2 + $0x1c] sm:$0xf] %v238
    %vm240 = vcmask 519171
    %vm241 = vsmask.f32 7950
    %vm242 = vmand %vm240, %vm241
    %v243 = vld [vmem:[#allocation2 + $0xc] sm:$0x8]
    %v244 = vsel %vm242, 0, %v243
    %245 = vst [vmem:[#allocation2 + $0xc] sm:$0x8] %v244
    %v246 = vld [vmem:[#allocation2 + $0x1c] sm:$0x8]
    %v247 = vsel %vm242, 0, %v246
    %248 = vst [vmem:[#allocation2 + $0x1c] sm:$0x8] %v247
    %v249 = vld [vmem:[#allocation2] sm:$0xff]
    %v250 = vld [vmem:[#allocation2 + $0x8] sm:$0xff]
    %v251 = vld [vmem:[#allocation2 + $0x10] sm:$0xff]
    %v252 = vld [vmem:[#allocation2 + $0x18] sm:$0xff]
    %v253 = vld [vmem:[#allocation7] sm:$0xf]
    %v254 = vld [vmem:[#allocation7 + $0x4] sm:$0xf]
    %v255 = vld [vmem:[#allocation7 + $0x8] sm:$0xf]
    %v256 = vld [vmem:[#allocation7 + $0xc] sm:$0xf]
    %v257 = vld [vmem:[#allocation7 + $0x10] sm:$0xf]
    %v258 = vld [vmem:[#allocation7 + $0x14] sm:$0xf]
    %v259 = vld [vmem:[#allocation7 + $0x18] sm:$0xf]
    %v260 = vld [vmem:[#allocation7 + $0x1c] sm:$0xf]
    %v261 = vld [vmem:[#allocation7 + $0x20] sm:$0xf]
    %v262 = vld [vmem:[#allocation7 + $0x24] sm:$0xf]
    %v263 = vld [vmem:[#allocation7 + $0x28] sm:$0xf]
    %v264 = vld [vmem:[#allocation7 + $0x2c] sm:$0xf]
    %v265 = vld [vmem:[#allocation7 + $0x30] sm:$0xf]
    %v266 = vld [vmem:[#allocation7 + $0x34] sm:$0xf]
    %v267 = vld [vmem:[#allocation7 + $0x38] sm:$0xf]
    %v268 = vld [vmem:[#allocation7 + $0x3c] sm:$0xf]
    %v269 = vld [vmem:[#allocation7 + $0x40] sm:$0xf]
    %v270 = vld [vmem:[#allocation7 + $0x44] sm:$0xf]
    %v271 = vld [vmem:[#allocation7 + $0x48] sm:$0xf]
    %v272 = vld [vmem:[#allocation7 + $0x4c] sm:$0xf]
    %v273 = vld [vmem:[#allocation7 + $0x50] sm:$0xf]
    %v274 = vld [vmem:[#allocation7 + $0x54] sm:$0xf]
    %v275 = vld [vmem:[#allocation7 + $0x58] sm:$0xf]
    %v276 = vld [vmem:[#allocation7 + $0x5c] sm:$0xf]
    %v281 = vunpack.c.l.b16 %v249
    %v282 = vunpack.c.h.b16 %v249
    %v283 = vunpack.c.l.b16 %v250
    %v284 = vunpack.c.h.b16 %v250
    %v285 = vunpack.c.l.b16 %v251
    %v286 = vunpack.c.h.b16 %v251
    %v287 = vunpack.c.l.b16 %v252
    %v288 = vunpack.c.h.b16 %v252
    %v289 = vpack.c.b16 %v283, %v281
    %v290 = vpack.c.b16 %v284, %v282
    %v291 = vpack.c.b16 %v287, %v285
    %v292 = vpack.c.b16 %v288, %v286
    %v319 = vunpack.c.l.b16 %v253
    %v320 = vunpack.c.l.b16 %v254
    %v321 = vunpack.c.l.b16 %v255
    %v322 = vunpack.c.l.b16 %v256
    %v323 = vunpack.c.l.b16 %v257
    %v324 = vunpack.c.l.b16 %v258
    %v325 = vunpack.c.l.b16 %v259
    %v326 = vunpack.c.l.b16 %v260
    %v327 = vunpack.c.l.b16 %v261
    %v328 = vunpack.c.l.b16 %v262
    %v329 = vunpack.c.l.b16 %v263
    %v330 = vunpack.c.l.b16 %v264
    %v331 = vunpack.c.l.b16 %v265
    %v332 = vunpack.c.l.b16 %v266
    %v333 = vunpack.c.l.b16 %v267
    %v334 = vunpack.c.l.b16 %v268
    %v335 = vunpack.c.l.b16 %v269
    %v336 = vunpack.c.l.b16 %v270
    %v337 = vunpack.c.l.b16 %v271
    %v338 = vunpack.c.l.b16 %v272
    %v339 = vunpack.c.l.b16 %v273
    %v340 = vunpack.c.l.b16 %v274
    %v341 = vunpack.c.l.b16 %v275
    %v342 = vunpack.c.l.b16 %v276
    %v343 = vpack.c.b16 %v320, %v319
    %v344 = vpack.c.b16 %v322, %v321
    %v345 = vpack.c.b16 %v324, %v323
    %v346 = vpack.c.b16 %v326, %v325
    %v347 = vpack.c.b16 %v328, %v327
    %v348 = vpack.c.b16 %v330, %v329
    %v349 = vpack.c.b16 %v332, %v331
    %v350 = vpack.c.b16 %v334, %v333
    %v351 = vpack.c.b16 %v336, %v335
    %v352 = vpack.c.b16 %v338, %v337
    %v353 = vpack.c.b16 %v340, %v339
    %v354 = vpack.c.b16 %v342, %v341
    %vm367 = vcmask 523264
    %v369 = vsel %vm367, %v290, 0
    %v372 = vsel %vm367, %v292, 0
    %374 = vmatprep.subr.bf16.mxu0 0
    %375 = vmatpush1.bf16.msra.mxu0 %v350
    %376 = vmatprep.subr.bf16.mxu0 0
    %377 = vmatpush1.bf16.msra.mxu0 %v349
    %378 = vmatprep.subr.bf16.mxu0 0
    %379 = vmatpush1.bf16.msra.mxu0 %v348
    %380 = vmatprep.subr.bf16.mxu0 0
    %381 = vmatpush1.bf16.msra.mxu0 %v347
    %382 = vmatprep.subr.bf16.mxu0 0
    %383 = vmatpush1.bf16.msra.mxu0 %v346
    %384 = vmatprep.subr.bf16.mxu0 0
    %385 = vmatpush1.bf16.msra.mxu0 %v345
    %386 = vmatprep.subr.bf16.mxu0 0
    %387 = vmatpush1.bf16.msra.mxu0 %v344
    %388 = vmatprep.subr.bf16.mxu0 0
    %389 = vmatpush1.bf16.msra.mxu0 %v343
    %390 = vmatprep.subr.bf16.mxu0 0
    %391 = vmatpush2.bf16.msra.mxu0 0
    %392 = vmatprep.subr.bf16.mxu0 0
    %393 = vmatpush2.bf16.msra.mxu0 0
    %394 = vmatprep.subr.bf16.mxu0 0
    %395 = vmatpush2.bf16.msra.mxu0 0
    %396 = vmatprep.subr.bf16.mxu0 0
    %397 = vmatpush2.bf16.msra.mxu0 0
    %398 = vmatprep.subr.bf16.mxu0 0
    %399 = vmatpush2.bf16.msra.mxu0 %v354
    %400 = vmatprep.subr.bf16.mxu0 0
    %401 = vmatpush2.bf16.msra.mxu0 %v353
    %402 = vmatprep.subr.bf16.mxu0 0
    %403 = vmatpush2.bf16.msra.mxu0 %v352
    %404 = vmatprep.subr.bf16.mxu0 0
    %405 = vmatpush2.bf16.msra.mxu0 %v351
    %406 = vmatprep.mubr.bf16.mxu0 %v369
    %407 = vmatmul.mubr.bf16.gmra.mxu0 %v289
    %v408 = vpop.f32.mrf.mxu0
    %v409 = vadd.f32 0.0, %v408
    %v410 = vpop.f32.mrf.mxu0
    %v411 = vpop.f32.mrf.mxu0
    %v412 = vadd.f32 0.0, %v411
    %v413 = vpop.f32.mrf.mxu0
    %414 = vmatprep.mubr.bf16.mxu0 %v372
    %415 = vmatmul.mubr.bf16.gmra.mxu0 %v291
    %v416 = vpop.f32.mrf.mxu0
    %v417 = vadd.f32 0.0, %v416
    %v418 = vpop.f32.mrf.mxu0
    %v419 = vpop.f32.mrf.mxu0
    %v420 = vadd.f32 0.0, %v419
    %v421 = vpop.f32.mrf.mxu0
    %422 = vdwg.mxu0
    %v423 = vld [vmem:[%s4] sm:$0x1]
    %v425 = vlaneseq
    %v426 = vshrl.u32 %v425, 7
    %v427 = vsub.s32 0, %v426
    %v428 = vrot.slane %v423, %v427
    %v430 = vmul.f32 %v409, %v428
    %v431 = vmul.f32 %v412, %v428
    %v432 = vmul.f32 %v417, %v428
    %v433 = vmul.f32 %v420, %v428
    %s434 = sld [smem:[#allocation3]]
    %v435 = vstv %s434
    %v436 = vmul.f32 %v57, %v435
    %v437 = vmul.f32 %v58, %v435
    %v438 = vmul.f32 %v59, %v435
    %v439 = vmul.f32 %v60, %v435
    %444 = vrot.lane.b32.xlu0 %v436, 64
    %v445 = vpop.permute.xlu0 %444
    %446 = vrot.lane.b32.xlu0 %v437, 64
    %v447 = vpop.permute.xlu0 %446
    %448 = vrot.lane.b32.xlu0 %v438, 64
    %v449 = vpop.permute.xlu0 %448
    %450 = vrot.lane.b32.xlu0 %v439, 64
    %v451 = vpop.permute.xlu0 %450
    %v456 = vsel %vm367, %v436, %v445
    %v457 = vsel %vm367, %v437, %v447
    %v458 = vsel %vm367, %v438, %v449
    %v459 = vsel %vm367, %v439, %v451
    %v460 = vadd.f32 %v430, %v456
    %v461 = vadd.f32 %v431, %v457
    %v462 = vadd.f32 %v432, %v458
    %v463 = vadd.f32 %v433, %v459
    %464 = vst [vmem:[#allocation9] sm:$0xff] %v460
    %465 = vst [vmem:[#allocation9 + $0x8] sm:$0xff] %v461
    %466 = vst [vmem:[#allocation9 + $0x10] sm:$0xff] %v462
    %467 = vst [vmem:[#allocation9 + $0x18] sm:$0xff] %v463
    // Predicated region
    $region38: #{tpu_custom_call.1} parent=1 // pred_check
      _
    $region39: #{tpu_custom_call.1} parent=1 // pred_check_branch
      %469 = sbr.rel (0) target = $region41
    $region40: #{tpu_custom_call.1} parent=1 // pred_region
      %s471 = ssub.s32 512, 512
      %472 = vsyncadd [#allocation6], %s471
      %s473 = sshll.u32 [#allocation9], 4
      %s474 = int_to_ptr.vmem [resolvable:$true] %s473
      %479 = dma.vmem_to_hbm [thread:$0]  %s474, 512, %s7, [#allocation6], 128, 128, 8
    $region41: #{tpu_custom_call.1} parent=1 // pred_fallthru
      _
    // Predicated region
    $region42: #{tpu_custom_call.1} parent=1 // pred_check
      _
    $region43: #{tpu_custom_call.1} parent=1 // pred_check_branch
      %481 = sbr.rel (0) target = $region45
    $region44: #{tpu_custom_call.1} parent=1 // pred_region
      %482 = dma.done [#allocation6], 512
    $region45: #{tpu_custom_call.1} parent=1 // pred_fallthru
      _
    %483 = vsyncpa [#allocation5], 1
    %484 = vsyncpa [#allocation8], 1
    %485 = vsyncpa [#allocation6], 1

</llo_original>
